<compile_context>
chip_gen: v6e
topology: v6e:2x2x1
jax: 0.10.0
libtpu: 0.0.40
codegen_flags: <defaults>
</compile_context>

<pallas_src>
import math
from functools import partial

import jax
import jax.numpy as jnp
from jax.experimental import pallas as pl
from jax.experimental.pallas import tpu as pltpu


# ----------------------------------------------------------------------------
# Activations (ACT2FN subset), applied inside the kernel epilogue in f32.
# ----------------------------------------------------------------------------
_GELU_C = math.sqrt(2.0 / math.pi)


def _apply_act(y, act):
    if act in ("none", "linear", "identity"):
        return y
    if act == "relu":
        return jnp.maximum(y, 0.0)
    if act == "tanh":
        return jnp.tanh(y)
    if act in ("silu", "swish"):
        return y * jax.nn.sigmoid(y)
    if act in ("gelu", "gelu_new"):
        # TODO(synk): HF 'gelu' is the exact erf form; the tanh approximation is
        # used here to guarantee Mosaic lowering (the demo below uses relu).
        return 0.5 * y * (1.0 + jnp.tanh(_GELU_C * (y + 0.044715 * y * y * y)))
    raise ValueError(f"unsupported activation: {act}")


# ----------------------------------------------------------------------------
# Tiling helpers
# ----------------------------------------------------------------------------
def _pick_tile(dim, target, mult):
    """Largest tile <= target that divides `dim` and is a multiple of `mult`;
    falls back to the full dim (full-block exemption of the (8,128) rule)."""
    if dim <= target:
        return dim
    t = (target // mult) * mult
    while t >= mult:
        if dim % t == 0:
            return t
        t -= mult
    return dim


# ----------------------------------------------------------------------------
# Kernel:  y = act(x @ W) + bias    (MXU matmul + fused VPU epilogue)
# Works both as a single-K kernel (no scratch) and K-tiled (f32 accumulator).
# ----------------------------------------------------------------------------
def _kron_dense_kernel(x_ref, w_ref, b_ref, o_ref, *scratch, act, compute_dtype):
    xv = x_ref[...]
    wv = w_ref[...]
    if compute_dtype is not None:          # bf16 operands for the MXU
        xv = xv.astype(compute_dtype)
        wv = wv.astype(compute_dtype)
    part = jnp.dot(xv, wv, preferred_element_type=jnp.float32)   # f32 accumulation

    if scratch:                            # K is tiled: accumulate across grid axis 2
        (acc_ref,) = scratch
        k = pl.program_id(2)

        @pl.when(k == 0)
        def _():
            acc_ref[...] = jnp.zeros_like(acc_ref)

        acc_ref[...] += part

        @pl.when(k == pl.num_programs(2) - 1)
        def _():
            y = _apply_act(acc_ref[...], act) + b_ref[...].astype(jnp.float32)
            o_ref[...] = y.astype(o_ref.dtype)
    else:                                  # full-K block: write directly
        y = _apply_act(part, act) + b_ref[...].astype(jnp.float32)
        o_ref[...] = y.astype(o_ref.dtype)


def kron_matmul(x2, w, bias_row, *, act="none", compute_dtype=None, out_dtype=None,
                tm_target=256, tn_target=1024, vmem_budget=20 * 1024 * 1024):
    """Fused  y = act(x2 @ w) + bias_row  (KroneckerLayer epilogue order)."""
    M, K = x2.shape
    Kw, N = w.shape
    assert K == Kw, (x2.shape, w.shape)
    assert bias_row.shape == (1, N)
    out_dtype = x2.dtype if out_dtype is None else out_dtype

    tm = _pick_tile(M, tm_target, 8)
    tn = _pick_tile(N, tn_target, 128) if (N % 128 == 0 and N > tn_target) else N

    def footprint(tk):
        # double-buffered x/w/out blocks + f32 accumulator (planned in f32 bytes)
        return (2 * (tm * tk + tk * tn + tm * tn) + tm * tn) * 4

    tk = K
    if footprint(K) > vmem_budget:
        for cand in (2048, 1024, 512, 256, 128):
            if cand < K and K % cand == 0 and footprint(cand) <= vmem_budget:
                tk = cand
                break

    nm, nn, nk = M // tm, N // tn, K // tk
    assert M % tm == 0 and N % tn == 0 and K % tk == 0

    kernel = partial(_kron_dense_kernel, act=act, compute_dtype=compute_dtype)

    if nk == 1:
        # Full-K blocks; N outer so the weight block is invariant over the inner
        # (row) sweep and is DMA'd into VMEM only once per output-column tile.
        grid = (nn, nm)
        in_specs = [
            pl.BlockSpec((tm, K), lambda j, i: (i, 0)),    # activations
            pl.BlockSpec((K, tn), lambda j, i: (0, j)),    # kron(B, A) block
            pl.BlockSpec((1, tn), lambda j, i: (0, j)),    # bias
        ]
        out_specs = pl.BlockSpec((tm, tn), lambda j, i: (i, j))
        scratch_shapes = []
        dims = ("parallel", "parallel")
    else:
        # K-tiled fallback for very large in_features: canonical accumulator matmul.
        grid = (nm, nn, nk)
        in_specs = [
            pl.BlockSpec((tm, tk), lambda i, j, k: (i, k)),
            pl.BlockSpec((tk, tn), lambda i, j, k: (k, j)),
            pl.BlockSpec((1, tn), lambda i, j, k: (0, j)),
        ]
        out_specs = pl.BlockSpec((tm, tn), lambda i, j, k: (i, j))
        scratch_shapes = [pltpu.VMEM((tm, tn), jnp.float32)]
        dims = ("parallel", "parallel", "arbitrary")

    return pl.pallas_call(
        kernel,
        out_shape=jax.ShapeDtypeStruct((M, N), out_dtype),
        grid=grid,
        in_specs=in_specs,
        out_specs=out_specs,
        scratch_shapes=scratch_shapes,
        compiler_params=pltpu.CompilerParams(
            dimension_semantics=dims,
            # 32 MiB is above the v5e 16 MiB scoped default and safe on v7x (64 MiB
            # physical); the planner above keeps block footprints under ~20 MiB.
            vmem_limit_bytes=32 * 1024 * 1024,
        ),
    )(x2, w, bias_row)


# ----------------------------------------------------------------------------
# KroneckerLayer forward
# ----------------------------------------------------------------------------
def kronecker_layer_forward(x, kron_A, kron_B, kron_bias, *, r, activation="relu",
                            compute_dtype=None, tm_target=256, tn_target=1024,
                            vmem_budget=20 * 1024 * 1024):
    """y = activation( dropout(x) @ kron(kron_B, kron_A) ) + kron_bias

    TODO(synk): kronecker_dropout (nn.Dropout) is the identity at inference and is
    not implemented.  For tie_weights=True simply pass kron_B = kron_A.T.
    """
    r0, r1 = int(r[0]), int(r[-1])
    assert kron_A.shape == (r0, r1)
    p, q = kron_B.shape
    n_in, n_out = p * r0, q * r1
    assert x.shape[-1] == n_in and kron_bias.shape == (n_out,)

    # Materialize kron(B, A) once per call: weight-sized wrapper glue, cost is
    # independent of the batch (same ordering as torch.kron(B, A)).
    w = jnp.kron(kron_B, kron_A)                     # (n_in, n_out)

    lead = x.shape[:-1]
    M = math.prod(lead)
    x2 = x.reshape(M, n_in)

    y = kron_matmul(x2, w, kron_bias.reshape(1, n_out), act=activation,
                    compute_dtype=compute_dtype, out_dtype=x.dtype,
                    tm_target=tm_target, tn_target=tn_target,
                    vmem_budget=vmem_budget)
    return y.reshape(*lead, n_out)


# ----------------------------------------------------------------------------
# Pure-JAX reference (dropout = identity at eval)
# ----------------------------------------------------------------------------
def _reference(x, kron_A, kron_B, kron_bias, activation):
    w = jnp.kron(kron_B, kron_A)
    y = jnp.einsum("...i,io->...o", x, w)
    return _apply_act(y, activation) + kron_bias


# ----------------------------------------------------------------------------
if __name__ == "__main__":
    # Small shapes consistent with the module:
    #   KroneckerLayer(in_features=256, out_features=256, r=[8, 8], ...),
    #   x of shape (batch=2, seq=8, in_features).
    batch, seq = 2, 8
    in_features, out_features = 256, 256
    r = (8, 8)
    activation = "relu"

    key = jax.random.PRNGKey(0)
    kx, ka, kb, kc = jax.random.split(key, 4)
    x = jax.random.normal(kx, (batch, seq, in_features), dtype=jnp.float32)
    # NOTE: the module's untied init zeroes kronecker_B, which makes the forward
    # trivially act(0) + 0; random weights are used so the kernel is actually
    # exercised (tie_weights=True would pass kron_B = kron_A.T instead).
    kron_A = 0.02 * jax.random.normal(ka, (r[0], r[-1]), dtype=jnp.float32)
    kron_B = 0.02 * jax.random.normal(
        kb, (in_features // r[0], out_features // r[-1]), dtype=jnp.float32)
    kron_bias = 0.01 * jax.random.normal(kc, (out_features,), dtype=jnp.float32)

    ref = _reference(x, kron_A, kron_B, kron_bias, activation)

    # Primary path: single fused dense kernel (full-K blocks), act+bias epilogue.
    fwd = jax.jit(partial(kronecker_layer_forward, r=r, activation=activation))
    out = fwd(x, kron_A, kron_B, kron_bias)
    jax.block_until_ready(out)
    assert out.shape == (batch, seq, out_features)
    assert jnp.allclose(out, ref, rtol=2e-3, atol=1e-5), "fused dense path mismatch"

    # K-tiled accumulator path, forced with a tiny VMEM budget -- exercises the
    # 3-axis grid that very large in_features would select automatically.
    out_ktiled = kronecker_layer_forward(x, kron_A, kron_B, kron_bias, r=r,
                                         activation=activation,
                                         vmem_budget=400_000)
    jax.block_until_ready(out_ktiled)
    assert jnp.allclose(out_ktiled, ref, rtol=2e-3, atol=1e-5), "K-tiled path mismatch"

    # bf16 MXU operands (f32 accumulation + f32 epilogue).
    out_bf16 = kronecker_layer_forward(x, kron_A, kron_B, kron_bias, r=r,
                                       activation=activation,
                                       compute_dtype=jnp.bfloat16)
    jax.block_until_ready(out_bf16)
    assert jnp.allclose(out_bf16, ref, rtol=1e-1, atol=1e-3), "bf16 path mismatch"

    print("KERNEL_OK")
</pallas_src>

<mosaic_0001>
module attributes {stable_mosaic.version = 11 : i64} {
  func.func @_kron_dense_kernel(%arg0: i32, %arg1: i32, %arg2: memref<16x256xf32, #tpu.memory_space<vmem>>, %arg3: memref<256x256xf32, #tpu.memory_space<vmem>>, %arg4: memref<1x256xf32, #tpu.memory_space<vmem>>, %arg5: memref<16x256xf32, #tpu.memory_space<vmem>>) attributes {dimension_semantics = [#tpu.dimension_semantics<parallel>, #tpu.dimension_semantics<parallel>], iteration_bounds = array<i64: 1, 1>, scalar_prefetch = 0 : i64, scratch_operands = 0 : i64, tpu.core_type = #tpu.core_type<tc>, window_params = [{transform_indices = @transform_0, window_bounds = array<i64: 16, 256>}, {transform_indices = @transform_1, window_bounds = array<i64: 256, 256>}, {transform_indices = @transform_2, window_bounds = array<i64: 1, 256>}, {transform_indices = @transform_3, window_bounds = array<i64: 16, 256>}]} {
    %c0 = arith.constant 0 : index
    %c0_0 = arith.constant 0 : index
    %0 = vector.load %arg2[%c0, %c0_0] : memref<16x256xf32, #tpu.memory_space<vmem>>, vector<16x256xf32>
    %c0_1 = arith.constant 0 : index
    %c0_2 = arith.constant 0 : index
    %1 = vector.load %arg3[%c0_1, %c0_2] : memref<256x256xf32, #tpu.memory_space<vmem>>, vector<256x256xf32>
    %cst = arith.constant dense<0.000000e+00> : vector<16x256xf32>
    %2 = tpu.matmul %0, %1, %cst {dimension_numbers = #tpu.dot_dimension_numbers<[1], [0], [0], [1], [0, 0, 1, 1], [], []>} : vector<16x256xf32>, vector<256x256xf32>, vector<16x256xf32> -> vector<16x256xf32>
    %cst_3 = arith.constant 0.000000e+00 : f32
    %3 = vector.broadcast %cst_3 : f32 to vector<16x256xf32>
    %4 = arith.maximumf %2, %3 : vector<16x256xf32>
    %c0_4 = arith.constant 0 : index
    %c0_5 = arith.constant 0 : index
    %5 = vector.load %arg4[%c0_4, %c0_5] : memref<1x256xf32, #tpu.memory_space<vmem>>, vector<1x256xf32>
    %6 = vector.broadcast %5 : vector<1x256xf32> to vector<16x256xf32>
    %7 = arith.addf %4, %6 : vector<16x256xf32>
    %c0_6 = arith.constant 0 : index
    %c0_7 = arith.constant 0 : index
    %8 = vector.load %arg5[%c0_6, %c0_7] : memref<16x256xf32, #tpu.memory_space<vmem>>, vector<16x256xf32>
    tpu.vector_store %arg5[%c0_6, %c0_7], %7 {strides = array<i32>} : memref<16x256xf32, #tpu.memory_space<vmem>>, vector<16x256xf32>,
    return
  }
  func.func @transform_0(%arg0: i32, %arg1: i32) -> (i32, i32) {
    %c0_i32 = arith.constant 0 : i32
    %c0_i32_0 = arith.constant 0 : i32
    return %arg1, %c0_i32 : i32, i32
  }
  func.func @transform_1(%arg0: i32, %arg1: i32) -> (i32, i32) {
    %c0_i32 = arith.constant 0 : i32
    %c0_i32_0 = arith.constant 0 : i32
    return %c0_i32, %arg0 : i32, i32
  }
  func.func @transform_2(%arg0: i32, %arg1: i32) -> (i32, i32) {
    %c0_i32 = arith.constant 0 : i32
    %c0_i32_0 = arith.constant 0 : i32
    return %c0_i32, %arg0 : i32, i32
  }
  func.func @transform_3(%arg0: i32, %arg1: i32) -> (i32, i32) {
    %c0_i32 = arith.constant 0 : i32
    return %arg1, %arg0 : i32, i32
  }
}

</mosaic_0001>

<llo_original>
// kernel: kronecker_layer_forward.1
$region0: #{kronecker_layer_forward.1}
  #allocation0 [shape = 'u32[]', space=smem, size = 0x4, offset = 0x4, fixed_abs, tag = 'smem constant byte address 0x4 - core index']
  #allocation1 [shape = 'u32[144,128]{1,0:T(1,128)}', space=vmem, size = 0x12000, scoped, tag = 'internal scratch']
  %s0 = inlined_call_operand.vmem [shape: f32[16,256], index: 0, kind: input, shape index: {}]
  %s1 = inlined_call_operand.vmem [shape: f32[256,256], index: 1, kind: input, shape index: {}]
  %s2 = inlined_call_operand.vmem [shape: f32[1,256], index: 2, kind: input, shape index: {}]
  %s3 = inlined_call_operand.hbm [shape: f32[16,256], index: 3, kind: output, shape index: {}]
  %s4 = sld [smem:[#allocation0]]
  $region22: #{kronecker_layer_forward.1} parent=0
    _
  %s6 = ssub.s32 1, %s4
  %s7 = scalar_select 0, %s6, %s4
  $region1: #{kronecker_layer_forward.1} parent=0
    #allocation2 [shape = 'u8[16384]{0}', space=vmem, size = 0x4000, scoped, tag = 'output window, operand 0, single buffered']
    #allocation3 [shape = 's32[1]{0}', space=sflag, size = 0x4, scoped, tag = 'scoped memory for kronecker_layer_forward.1']
    %8 = vsyncpa [#allocation3], 0
    // Predicated region
    $region2: #{kronecker_layer_forward.1} parent=1 // pred_check
      _
    $region3: #{kronecker_layer_forward.1} parent=1 // pred_check_branch
      %10 = sbr.rel (0) target = $region5
    $region4: #{kronecker_layer_forward.1} parent=1 // pred_region
      _
    $region5: #{kronecker_layer_forward.1} parent=1 // pred_fallthru
      _
    // Predicated region
    $region6: #{kronecker_layer_forward.1} parent=1 // pred_check
      _
    $region7: #{kronecker_layer_forward.1} parent=1 // pred_check_branch
      %12 = sbr.rel (0) target = $region9
    $region8: #{kronecker_layer_forward.1} parent=1 // pred_region
      _
    $region9: #{kronecker_layer_forward.1} parent=1 // pred_fallthru
      _
    // Predicated region
    $region10: #{kronecker_layer_forward.1} parent=1 // pred_check
      _
    $region11: #{kronecker_layer_forward.1} parent=1 // pred_check_branch
      %14 = sbr.rel (0) target = $region13
    $region12: #{kronecker_layer_forward.1} parent=1 // pred_region
      _
    $region13: #{kronecker_layer_forward.1} parent=1 // pred_fallthru
      _
    %v15 = vld [vmem:[%s0] sm:$0xff]
    %v16 = vld [vmem:[%s0 + $0x8] sm:$0xff]
    %v17 = vld [vmem:[%s0 + $0x10] sm:$0xff]
    %v18 = vld [vmem:[%s0 + $0x18] sm:$0xff]
    %v19 = vld [vmem:[%s1] sm:$0xff]
    %v20 = vld [vmem:[%s1 + $0x8] sm:$0xff]
    %v21 = vld [vmem:[%s1 + $0x10] sm:$0xff]
    %v22 = vld [vmem:[%s1 + $0x18] sm:$0xff]
    %v23 = vld [vmem:[%s1 + $0x20] sm:$0xff]
    %v24 = vld [vmem:[%s1 + $0x28] sm:$0xff]
    %v25 = vld [vmem:[%s1 + $0x30] sm:$0xff]
    %v26 = vld [vmem:[%s1 + $0x38] sm:$0xff]
    %v27 = vld [vmem:[%s1 + $0x40] sm:$0xff]
    %v28 = vld [vmem:[%s1 + $0x48] sm:$0xff]
    %v29 = vld [vmem:[%s1 + $0x50] sm:$0xff]
    %v30 = vld [vmem:[%s1 + $0x58] sm:$0xff]
    %v31 = vld [vmem:[%s1 + $0x60] sm:$0xff]
    %v32 = vld [vmem:[%s1 + $0x68] sm:$0xff]
    %v33 = vld [vmem:[%s1 + $0x70] sm:$0xff]
    %v34 = vld [vmem:[%s1 + $0x78] sm:$0xff]
    %v35 = vld [vmem:[%s1 + $0x80] sm:$0xff]
    %v36 = vld [vmem:[%s1 + $0x88] sm:$0xff]
    %v37 = vld [vmem:[%s1 + $0x90] sm:$0xff]
    %v38 = vld [vmem:[%s1 + $0x98] sm:$0xff]
    %v39 = vld [vmem:[%s1 + $0xa0] sm:$0xff]
    %v40 = vld [vmem:[%s1 + $0xa8] sm:$0xff]
    %v41 = vld [vmem:[%s1 + $0xb0] sm:$0xff]
    %v42 = vld [vmem:[%s1 + $0xb8] sm:$0xff]
    %v43 = vld [vmem:[%s1 + $0xc0] sm:$0xff]
    %v44 = vld [vmem:[%s1 + $0xc8] sm:$0xff]
    %v45 = vld [vmem:[%s1 + $0xd0] sm:$0xff]
    %v46 = vld [vmem:[%s1 + $0xd8] sm:$0xff]
    %v47 = vld [vmem:[%s1 + $0xe0] sm:$0xff]
    %v48 = vld [vmem:[%s1 + $0xe8] sm:$0xff]
    %v49 = vld [vmem:[%s1 + $0xf0] sm:$0xff]
    %v50 = vld [vmem:[%s1 + $0xf8] sm:$0xff]
    %v51 = vld [vmem:[%s1 + $0x100] sm:$0xff]
    %v52 = vld [vmem:[%s1 + $0x108] sm:$0xff]
    %v53 = vld [vmem:[%s1 + $0x110] sm:$0xff]
    %v54 = vld [vmem:[%s1 + $0x118] sm:$0xff]
    %v55 = vld [vmem:[%s1 + $0x120] sm:$0xff]
    %v56 = vld [vmem:[%s1 + $0x128] sm:$0xff]
    %v57 = vld [vmem:[%s1 + $0x130] sm:$0xff]
    %v58 = vld [vmem:[%s1 + $0x138] sm:$0xff]
    %v59 = vld [vmem:[%s1 + $0x140] sm:$0xff]
    %v60 = vld [vmem:[%s1 + $0x148] sm:$0xff]
    %v61 = vld [vmem:[%s1 + $0x150] sm:$0xff]
    %v62 = vld [vmem:[%s1 + $0x158] sm:$0xff]
    %v63 = vld [vmem:[%s1 + $0x160] sm:$0xff]
    %v64 = vld [vmem:[%s1 + $0x168] sm:$0xff]
    %v65 = vld [vmem:[%s1 + $0x170] sm:$0xff]
    %v66 = vld [vmem:[%s1 + $0x178] sm:$0xff]
    %v67 = vld [vmem:[%s1 + $0x180] sm:$0xff]
    %v68 = vld [vmem:[%s1 + $0x188] sm:$0xff]
    %v69 = vld [vmem:[%s1 + $0x190] sm:$0xff]
    %v70 = vld [vmem:[%s1 + $0x198] sm:$0xff]
    %v71 = vld [vmem:[%s1 + $0x1a0] sm:$0xff]
    %v72 = vld [vmem:[%s1 + $0x1a8] sm:$0xff]
    %v73 = vld [vmem:[%s1 + $0x1b0] sm:$0xff]
    %v74 = vld [vmem:[%s1 + $0x1b8] sm:$0xff]
    %v75 = vld [vmem:[%s1 + $0x1c0] sm:$0xff]
    %v76 = vld [vmem:[%s1 + $0x1c8] sm:$0xff]
    %v77 = vld [vmem:[%s1 + $0x1d0] sm:$0xff]
    %v78 = vld [vmem:[%s1 + $0x1d8] sm:$0xff]
    %v79 = vld [vmem:[%s1 + $0x1e0] sm:$0xff]
    %v80 = vld [vmem:[%s1 + $0x1e8] sm:$0xff]
    %v81 = vld [vmem:[%s1 + $0x1f0] sm:$0xff]
    %v82 = vld [vmem:[%s1 + $0x1f8] sm:$0xff]
    %83 = vmatprep.subr.mxu0 %v50
    %84 = vmatpush1.msra.mxu0 %v49
    %85 = vmatprep.subr.mxu0 %v48
    %86 = vmatpush1.msra.mxu0 %v47
    %87 = vmatprep.subr.mxu0 %v46
    %88 = vmatpush1.msra.mxu0 %v45
    %89 = vmatprep.subr.mxu0 %v44
    %90 = vmatpush1.msra.mxu0 %v43
    %91 = vmatprep.subr.mxu0 %v42
    %92 = vmatpush1.msra.mxu0 %v41
    %93 = vmatprep.subr.mxu0 %v40
    %94 = vmatpush1.msra.mxu0 %v39
    %95 = vmatprep.subr.mxu0 %v38
    %96 = vmatpush1.msra.mxu0 %v37
    %97 = vmatprep.subr.mxu0 %v36
    %98 = vmatpush1.msra.mxu0 %v35
    %99 = vmatprep.subr.mxu0 %v34
    %100 = vmatpush1.msra.mxu0 %v33
    %101 = vmatprep.subr.mxu0 %v32
    %102 = vmatpush1.msra.mxu0 %v31
    %103 = vmatprep.subr.mxu0 %v30
    %104 = vmatpush1.msra.mxu0 %v29
    %105 = vmatprep.subr.mxu0 %v28
    %106 = vmatpush1.msra.mxu0 %v27
    %107 = vmatprep.subr.mxu0 %v26
    %108 = vmatpush1.msra.mxu0 %v25
    %109 = vmatprep.subr.mxu0 %v24
    %110 = vmatpush1.msra.mxu0 %v23
    %111 = vmatprep.subr.mxu0 %v22
    %112 = vmatpush1.msra.mxu0 %v21
    %113 = vmatprep.subr.mxu0 %v20
    %114 = vmatpush1.msra.mxu0 %v19
    %115 = vmatprep.subr.mxu0 %v82
    %116 = vmatpush2.msra.mxu0 %v81
    %117 = vmatprep.subr.mxu0 %v80
    %118 = vmatpush2.msra.mxu0 %v79
    %119 = vmatprep.subr.mxu0 %v78
    %120 = vmatpush2.msra.mxu0 %v77
    %121 = vmatprep.subr.mxu0 %v76
    %122 = vmatpush2.msra.mxu0 %v75
    %123 = vmatprep.subr.mxu0 %v74
    %124 = vmatpush2.msra.mxu0 %v73
    %125 = vmatprep.subr.mxu0 %v72
    %126 = vmatpush2.msra.mxu0 %v71
    %127 = vmatprep.subr.mxu0 %v70
    %128 = vmatpush2.msra.mxu0 %v69
    %129 = vmatprep.subr.mxu0 %v68
    %130 = vmatpush2.msra.mxu0 %v67
    %131 = vmatprep.subr.mxu0 %v66
    %132 = vmatpush2.msra.mxu0 %v65
    %133 = vmatprep.subr.mxu0 %v64
    %134 = vmatpush2.msra.mxu0 %v63
    %135 = vmatprep.subr.mxu0 %v62
    %136 = vmatpush2.msra.mxu0 %v61
    %137 = vmatprep.subr.mxu0 %v60
    %138 = vmatpush2.msra.mxu0 %v59
    %139 = vmatprep.subr.mxu0 %v58
    %140 = vmatpush2.msra.mxu0 %v57
    %141 = vmatprep.subr.mxu0 %v56
    %142 = vmatpush2.msra.mxu0 %v55
    %143 = vmatprep.subr.mxu0 %v54
    %144 = vmatpush2.msra.mxu0 %v53
    %145 = vmatprep.subr.mxu0 %v52
    %146 = vmatpush2.msra.mxu0 %v51
    %147 = vmatprep.mubr.f32.mxu0 %v16
    %148 = vmatmul.mubr.f32.gmra.mxu0 %v15
    %v149 = vpop.f32.mrf.mxu0
    %v150 = vadd.f32 0.0, %v149
    %v151 = vpop.f32.mrf.mxu0
    %v152 = vadd.f32 0.0, %v151
    %153 = vmatprep.mubr.f32.mxu0 %v18
    %154 = vmatmul.mubr.f32.gmra.mxu0 %v17
    %v155 = vpop.f32.mrf.mxu0
    %v156 = vadd.f32 0.0, %v155
    %v157 = vpop.f32.mrf.mxu0
    %v158 = vadd.f32 0.0, %v157
    %159 = vdwg.mxu0
    %v160 = vmax.f32 %v150, 0.0
    %v161 = vmax.f32 %v152, 0.0
    %v162 = vmax.f32 %v156, 0.0
    %v163 = vmax.f32 %v158, 0.0
    %v164 = vld [vmem:[%s2] sm:$0x3]
    %v166 = vlaneseq
    %v167 = vshrl.u32 %v166, 7
    %v168 = vsub.s32 0, %v167
    %v169 = vrot.slane %v164, %v168
    %v170 = vlaneseq
    %v171 = vshrl.u32 %v170, 7
    %v172 = vsub.s32 1, %v171
    %v173 = vrot.slane %v164, %v172
    %v176 = vadd.f32 %v160, %v169
    %v177 = vadd.f32 %v161, %v173
    %v178 = vadd.f32 %v162, %v169
    %v179 = vadd.f32 %v163, %v173
    %180 = vst [vmem:[#allocation2] sm:$0xff] %v176
    %181 = vst [vmem:[#allocation2 + $0x8] sm:$0xff] %v177
    %182 = vst [vmem:[#allocation2 + $0x10] sm:$0xff] %v178
    %183 = vst [vmem:[#allocation2 + $0x18] sm:$0xff] %v179
    // Predicated region
    $region14: #{kronecker_layer_forward.1} parent=1 // pred_check
      _
    $region15: #{kronecker_layer_forward.1} parent=1 // pred_check_branch
      %185 = sbr.rel (0) target = $region17
    $region16: #{kronecker_layer_forward.1} parent=1 // pred_region
      %s187 = ssub.s32 512, 512
      %188 = vsyncadd [#allocation3], %s187
      %s189 = sshll.u32 [#allocation2], 4
      %s190 = int_to_ptr.vmem [resolvable:$true] %s189
      %195 = dma.vmem_to_hbm [thread:$0]  %s190, 512, %s3, [#allocation3], 256, 256, 16
    $region17: #{kronecker_layer_forward.1} parent=1 // pred_fallthru
      _
    // Predicated region
    $region18: #{kronecker_layer_forward.1} parent=1 // pred_check
      _
    $region19: #{kronecker_layer_forward.1} parent=1 // pred_check_branch
      %197 = sbr.rel (0) target = $region21
    $region20: #{kronecker_layer_forward.1} parent=1 // pred_region
      %198 = dma.done [#allocation3], 512
    $region21: #{kronecker_layer_forward.1} parent=1 // pred_fallthru
      _
    %199 = vsyncpa [#allocation3], 1

</llo_original>
